<compile_context>
chip_gen: v7x
topology: tpu7x:2x2x1
jax: 0.10.0
libtpu: 0.0.40
codegen_flags: <defaults>
</compile_context>

<pallas_src>
import functools
import math

import jax
import jax.numpy as jnp
from jax import lax
from jax.experimental import pallas as pl
from jax.experimental.pallas import tpu as pltpu


_LANE = 128
_SUBLANE = 8
_OUT_BLOCK_BYTES = 2 * 1024 * 1024      # per-output per-block VMEM budget
_MAX_SUBLANES_PER_BLOCK = 64            # 64 * 128 = 8192 features per block


def _round_up(x, m):
    return ((x + m - 1) // m) * m


def _if_encoder_kernel(x_ref, spikes_ref, volts_ref, v_scratch,
                       *, tt, scale, v_th, v_reset):
    t_idx = pl.program_id(1)            # time-block index (sequential axis)

    # Membrane potential starts at zero before the first timestep; VMEM
    # scratch carries it across the sequential time axis per feature block.
    @pl.when(t_idx == 0)
    def _():
        v_scratch[...] = jnp.zeros_like(v_scratch)

    # Constant over time: hoisted out of the per-timestep loop.  (Sb, 128)
    dv = jnp.float32(scale) * x_ref[...]

    one = jnp.float32(1.0)
    zero = jnp.float32(0.0)
    reset = jnp.float32(v_reset)
    thresh = jnp.float32(v_th)

    def step(i, v):
        v = v + dv
        mask = v > thresh                       # 1 cmp
        z = jnp.where(mask, one, zero)          # 1 select
        v = jnp.where(mask, reset, v)           # 1 select
        spikes_ref[i, :, :] = z                 # dense (Sb, 128) slab store
        volts_ref[i, :, :] = v
        return v

    v_scratch[...] = lax.fori_loop(
        0, tt, step, v_scratch[...], unroll=True if tt <= 16 else 8)


def if_constant_current_encode(x, seq_length, tau_mem_inv=1.0 / 0.01,
                               v_th=1.0, v_reset=0.0, dt=0.001):
    """Pallas implementation of IFConstantCurrentEncoder.forward.

    x: float array of any shape.  Returns (spikes, voltages), each float32
    with shape (seq_length, *x.shape).
    """
    orig_shape = tuple(x.shape)
    T = int(seq_length)
    F = math.prod(orig_shape)

    # ---- feature tiling: sublane-dense (S_pad, 128) layout ----------------
    S = pl.cdiv(F, _LANE)                       # sublane rows holding F feats
    n_fblocks = pl.cdiv(S, _MAX_SUBLANES_PER_BLOCK)
    if n_fblocks < 2 and S >= 2 * _SUBLANE:
        n_fblocks = 2                           # v7x megacore: 2 parallel blocks
    Sb = _round_up(max(1, pl.cdiv(S, n_fblocks)), _SUBLANE)
    S_pad = Sb * n_fblocks
    F_pad = S_pad * _LANE

    # ---- time tiling: as many steps per grid step as VMEM budget allows ---
    tt_cap = max(1, (_OUT_BLOCK_BYTES // 4) // (Sb * _LANE))
    if T <= tt_cap:
        Tt, T_pad = T, T                        # block == full time dim
    else:
        Tt = max(1, (tt_cap // 8) * 8)
        T_pad = _round_up(T, Tt)                # extra rows sliced off below
    n_tblocks = T_pad // Tt

    # ---- pack input: (S_pad, 128), zero-padded features never spike -------
    x_flat = jnp.ravel(x).astype(jnp.float32)
    if F_pad != F:
        x_flat = jnp.pad(x_flat, (0, F_pad - F))
    x2d = jnp.reshape(x_flat, (S_pad, _LANE))

    kernel = functools.partial(
        _if_encoder_kernel,
        tt=Tt, scale=float(dt) * float(tau_mem_inv),
        v_th=float(v_th), v_reset=float(v_reset),
    )

    out_shape = (
        jax.ShapeDtypeStruct((T_pad, S_pad, _LANE), jnp.float32),   # spikes
        jax.ShapeDtypeStruct((T_pad, S_pad, _LANE), jnp.float32),   # voltages
    )

    spikes, voltages = pl.pallas_call(
        kernel,
        out_shape=out_shape,
        grid_spec=pltpu.PrefetchScalarGridSpec(
            num_scalar_prefetch=0,
            grid=(n_fblocks, n_tblocks),        # time axis last (sequential)
            in_specs=[
                # x block resident across every time block of this feature
                # block.
                pl.BlockSpec((Sb, _LANE), lambda f, t: (f, 0)),
            ],
            out_specs=[
                pl.BlockSpec((Tt, Sb, _LANE), lambda f, t: (t, f, 0)),
                pl.BlockSpec((Tt, Sb, _LANE), lambda f, t: (t, f, 0)),
            ],
            scratch_shapes=[
                pltpu.VMEM((Sb, _LANE), jnp.float32),   # membrane potential
            ],
        ),
        compiler_params=pltpu.CompilerParams(
            # feature axis independent (megacore-shardable); time axis
            # carries state -> sequential.
            dimension_semantics=("parallel", "arbitrary"),
        ),
    )(x2d)

    # (T_pad, S_pad, 128) -> (T, F) -> original shape (contiguous reshapes).
    spikes = spikes[:T].reshape(T, F_pad)[:, :F].reshape((T,) + orig_shape)
    voltages = voltages[:T].reshape(T, F_pad)[:, :F].reshape((T,) + orig_shape)
    return spikes, voltages


def _reference(x, seq_length, tau_mem_inv=1.0 / 0.01, v_th=1.0,
               v_reset=0.0, dt=0.001):
    """Pure-JAX reference mirroring the PyTorch module."""
    def step(v, _):
        v = v + dt * tau_mem_inv * x
        z = (v > v_th).astype(v.dtype)
        v = v - z * (v - v_reset)
        return v, (z, v)

    v0 = jnp.zeros_like(x)
    _, (spikes, voltages) = jax.lax.scan(step, v0, None, length=seq_length)
    return spikes, voltages


if __name__ == "__main__":
    key = jax.random.PRNGKey(0)
    x_shape = (2, 4, 16, 16)        # (batch, channels, H, W) -> 2048 features
    seq_length = 8

    x = jax.random.uniform(key, x_shape, dtype=jnp.float32) * 2.0  # currents

    spikes, voltages = if_constant_current_encode(x, seq_length)
    jax.block_until_ready((spikes, voltages))

    ref_spikes, ref_voltages = _reference(x, seq_length)

    assert spikes.shape == (seq_length,) + x_shape
    assert voltages.shape == (seq_length,) + x_shape
    assert jnp.allclose(spikes, ref_spikes, atol=1e-6)
    assert jnp.allclose(voltages, ref_voltages, atol=1e-6)

    print("KERNEL_OK")
</pallas_src>

<mosaic_0001>
module attributes {stable_mosaic.version = 11 : i64} {
  func.func @_if_encoder_kernel(%arg0: i32, %arg1: i32, %arg2: memref<8x128xf32, #tpu.memory_space<vmem>>, %arg3: memref<8x8x128xf32, #tpu.memory_space<vmem>>, %arg4: memref<8x8x128xf32, #tpu.memory_space<vmem>>, %arg5: memref<8x128xf32, #tpu.memory_space<vmem>>) attributes {dimension_semantics = [#tpu.dimension_semantics<parallel>, #tpu.dimension_semantics<arbitrary>], iteration_bounds = array<i64: 2, 1>, scalar_prefetch = 0 : i64, scratch_operands = 1 : i64, tpu.core_type = #tpu.core_type<tc>, window_params = [{transform_indices = @transform_0, window_bounds = array<i64: 8, 128>}, {transform_indices = @transform_1, window_bounds = array<i64: 8, 8, 128>}, {transform_indices = @transform_2, window_bounds = array<i64: 8, 8, 128>}]} {
    %c0_i32 = arith.constant 0 : i32
    %0 = arith.cmpi eq, %arg1, %c0_i32 : i32
    %1 = arith.extui %0 : i1 to i32
    %c0_i32_0 = arith.constant 0 : i32
    %2 = arith.cmpi ne, %1, %c0_i32_0 : i32
    scf.if %2 {
      %cst_43 = arith.constant 0.000000e+00 : f32
      %136 = vector.broadcast %cst_43 : f32 to vector<8x128xf32>
      %c0_44 = arith.constant 0 : index
      %c0_45 = arith.constant 0 : index
      %137 = vector.load %arg5[%c0_44, %c0_45] : memref<8x128xf32, #tpu.memory_space<vmem>>, vector<8x128xf32>
      tpu.vector_store %arg5[%c0_44, %c0_45], %136 {strides = array<i32>} : memref<8x128xf32, #tpu.memory_space<vmem>>, vector<8x128xf32>,
    } else {
    }
    %c0 = arith.constant 0 : index
    %c0_1 = arith.constant 0 : index
    %3 = vector.load %arg2[%c0, %c0_1] : memref<8x128xf32, #tpu.memory_space<vmem>>, vector<8x128xf32>
    %cst = arith.constant 1.000000e-01 : f32
    %4 = vector.broadcast %cst : f32 to vector<8x128xf32>
    %5 = arith.mulf %4, %3 : vector<8x128xf32>
    %c0_2 = arith.constant 0 : index
    %c0_3 = arith.constant 0 : index
    %6 = vector.load %arg5[%c0_2, %c0_3] : memref<8x128xf32, #tpu.memory_space<vmem>>, vector<8x128xf32>
    %cst_4 = arith.constant 1.000000e+00 : f32
    %cst_5 = arith.constant 1.000000e+00 : f32
    %cst_6 = arith.constant 0.000000e+00 : f32
    %cst_7 = arith.constant 0.000000e+00 : f32
    %c0_i32_8 = arith.constant 0 : i32
    %7 = arith.addf %6, %5 : vector<8x128xf32>
    %8 = vector.broadcast %cst_4 : f32 to vector<8x128xf32>
    %9 = arith.cmpf ogt, %7, %8 : vector<8x128xf32>
    %10 = vector.broadcast %cst_5 : f32 to vector<8x128xf32>
    %11 = vector.broadcast %cst_6 : f32 to vector<8x128xf32>
    %12 = arith.select %9, %10, %11 : vector<8x128xi1>, vector<8x128xf32>
    %13 = vector.broadcast %cst_7 : f32 to vector<8x128xf32>
    %14 = arith.select %9, %13, %7 : vector<8x128xi1>, vector<8x128xf32>
    %15 = arith.index_cast %c0_i32_8 : i32 to index
    %c0_9 = arith.constant 0 : index
    %c0_10 = arith.constant 0 : index
    %16 = vector.load %arg3[%15, %c0_9, %c0_10] : memref<8x8x128xf32, #tpu.memory_space<vmem>>, vector<1x8x128xf32>
    %17 = vector.shape_cast %16 : vector<1x8x128xf32> to vector<8x128xf32>
    %18 = vector.shape_cast %12 : vector<8x128xf32> to vector<1x8x128xf32>
    tpu.vector_store %arg3[%15, %c0_9, %c0_10], %18 {strides = array<i32>} : memref<8x8x128xf32, #tpu.memory_space<vmem>>, vector<1x8x128xf32>,
    %19 = arith.index_cast %c0_i32_8 : i32 to index
    %c0_11 = arith.constant 0 : index
    %c0_12 = arith.constant 0 : index
    %20 = vector.load %arg4[%19, %c0_11, %c0_12] : memref<8x8x128xf32, #tpu.memory_space<vmem>>, vector<1x8x128xf32>
    %21 = vector.shape_cast %20 : vector<1x8x128xf32> to vector<8x128xf32>
    %22 = vector.shape_cast %14 : vector<8x128xf32> to vector<1x8x128xf32>
    tpu.vector_store %arg4[%19, %c0_11, %c0_12], %22 {strides = array<i32>} : memref<8x8x128xf32, #tpu.memory_space<vmem>>, vector<1x8x128xf32>,
    %c1_i32 = arith.constant 1 : i32
    %23 = arith.addf %14, %5 : vector<8x128xf32>
    %24 = vector.broadcast %cst_4 : f32 to vector<8x128xf32>
    %25 = arith.cmpf ogt, %23, %24 : vector<8x128xf32>
    %26 = vector.broadcast %cst_5 : f32 to vector<8x128xf32>
    %27 = vector.broadcast %cst_6 : f32 to vector<8x128xf32>
    %28 = arith.select %25, %26, %27 : vector<8x128xi1>, vector<8x128xf32>
    %29 = vector.broadcast %cst_7 : f32 to vector<8x128xf32>
    %30 = arith.select %25, %29, %23 : vector<8x128xi1>, vector<8x128xf32>
    %31 = arith.index_cast %c1_i32 : i32 to index
    %c0_13 = arith.constant 0 : index
    %c0_14 = arith.constant 0 : index
    %32 = vector.load %arg3[%31, %c0_13, %c0_14] : memref<8x8x128xf32, #tpu.memory_space<vmem>>, vector<1x8x128xf32>
    %33 = vector.shape_cast %32 : vector<1x8x128xf32> to vector<8x128xf32>
    %34 = vector.shape_cast %28 : vector<8x128xf32> to vector<1x8x128xf32>
    tpu.vector_store %arg3[%31, %c0_13, %c0_14], %34 {strides = array<i32>} : memref<8x8x128xf32, #tpu.memory_space<vmem>>, vector<1x8x128xf32>,
    %35 = arith.index_cast %c1_i32 : i32 to index
    %c0_15 = arith.constant 0 : index
    %c0_16 = arith.constant 0 : index
    %36 = vector.load %arg4[%35, %c0_15, %c0_16] : memref<8x8x128xf32, #tpu.memory_space<vmem>>, vector<1x8x128xf32>
    %37 = vector.shape_cast %36 : vector<1x8x128xf32> to vector<8x128xf32>
    %38 = vector.shape_cast %30 : vector<8x128xf32> to vector<1x8x128xf32>
    tpu.vector_store %arg4[%35, %c0_15, %c0_16], %38 {strides = array<i32>} : memref<8x8x128xf32, #tpu.memory_space<vmem>>, vector<1x8x128xf32>,
    %c2_i32 = arith.constant 2 : i32
    %39 = arith.addf %30, %5 : vector<8x128xf32>
    %40 = vector.broadcast %cst_4 : f32 to vector<8x128xf32>
    %41 = arith.cmpf ogt, %39, %40 : vector<8x128xf32>
    %42 = vector.broadcast %cst_5 : f32 to vector<8x128xf32>
    %43 = vector.broadcast %cst_6 : f32 to vector<8x128xf32>
    %44 = arith.select %41, %42, %43 : vector<8x128xi1>, vector<8x128xf32>
    %45 = vector.broadcast %cst_7 : f32 to vector<8x128xf32>
    %46 = arith.select %41, %45, %39 : vector<8x128xi1>, vector<8x128xf32>
    %47 = arith.index_cast %c2_i32 : i32 to index
    %c0_17 = arith.constant 0 : index
    %c0_18 = arith.constant 0 : index
    %48 = vector.load %arg3[%47, %c0_17, %c0_18] : memref<8x8x128xf32, #tpu.memory_space<vmem>>, vector<1x8x128xf32>
    %49 = vector.shape_cast %48 : vector<1x8x128xf32> to vector<8x128xf32>
    %50 = vector.shape_cast %44 : vector<8x128xf32> to vector<1x8x128xf32>
    tpu.vector_store %arg3[%47, %c0_17, %c0_18], %50 {strides = array<i32>} : memref<8x8x128xf32, #tpu.memory_space<vmem>>, vector<1x8x128xf32>,
    %51 = arith.index_cast %c2_i32 : i32 to index
    %c0_19 = arith.constant 0 : index
    %c0_20 = arith.constant 0 : index
    %52 = vector.load %arg4[%51, %c0_19, %c0_20] : memref<8x8x128xf32, #tpu.memory_space<vmem>>, vector<1x8x128xf32>
    %53 = vector.shape_cast %52 : vector<1x8x128xf32> to vector<8x128xf32>
    %54 = vector.shape_cast %46 : vector<8x128xf32> to vector<1x8x128xf32>
    tpu.vector_store %arg4[%51, %c0_19, %c0_20], %54 {strides = array<i32>} : memref<8x8x128xf32, #tpu.memory_space<vmem>>, vector<1x8x128xf32>,
    %c3_i32 = arith.constant 3 : i32
    %55 = arith.addf %46, %5 : vector<8x128xf32>
    %56 = vector.broadcast %cst_4 : f32 to vector<8x128xf32>
    %57 = arith.cmpf ogt, %55, %56 : vector<8x128xf32>
    %58 = vector.broadcast %cst_5 : f32 to vector<8x128xf32>
    %59 = vector.broadcast %cst_6 : f32 to vector<8x128xf32>
    %60 = arith.select %57, %58, %59 : vector<8x128xi1>, vector<8x128xf32>
    %61 = vector.broadcast %cst_7 : f32 to vector<8x128xf32>
    %62 = arith.select %57, %61, %55 : vector<8x128xi1>, vector<8x128xf32>
    %63 = arith.index_cast %c3_i32 : i32 to index
    %c0_21 = arith.constant 0 : index
    %c0_22 = arith.constant 0 : index
    %64 = vector.load %arg3[%63, %c0_21, %c0_22] : memref<8x8x128xf32, #tpu.memory_space<vmem>>, vector<1x8x128xf32>
    %65 = vector.shape_cast %64 : vector<1x8x128xf32> to vector<8x128xf32>
    %66 = vector.shape_cast %60 : vector<8x128xf32> to vector<1x8x128xf32>
    tpu.vector_store %arg3[%63, %c0_21, %c0_22], %66 {strides = array<i32>} : memref<8x8x128xf32, #tpu.memory_space<vmem>>, vector<1x8x128xf32>,
    %67 = arith.index_cast %c3_i32 : i32 to index
    %c0_23 = arith.constant 0 : index
    %c0_24 = arith.constant 0 : index
    %68 = vector.load %arg4[%67, %c0_23, %c0_24] : memref<8x8x128xf32, #tpu.memory_space<vmem>>, vector<1x8x128xf32>
    %69 = vector.shape_cast %68 : vector<1x8x128xf32> to vector<8x128xf32>
    %70 = vector.shape_cast %62 : vector<8x128xf32> to vector<1x8x128xf32>
    tpu.vector_store %arg4[%67, %c0_23, %c0_24], %70 {strides = array<i32>} : memref<8x8x128xf32, #tpu.memory_space<vmem>>, vector<1x8x128xf32>,
    %c4_i32 = arith.constant 4 : i32
    %71 = arith.addf %62, %5 : vector<8x128xf32>
    %72 = vector.broadcast %cst_4 : f32 to vector<8x128xf32>
    %73 = arith.cmpf ogt, %71, %72 : vector<8x128xf32>
    %74 = vector.broadcast %cst_5 : f32 to vector<8x128xf32>
    %75 = vector.broadcast %cst_6 : f32 to vector<8x128xf32>
    %76 = arith.select %73, %74, %75 : vector<8x128xi1>, vector<8x128xf32>
    %77 = vector.broadcast %cst_7 : f32 to vector<8x128xf32>
    %78 = arith.select %73, %77, %71 : vector<8x128xi1>, vector<8x128xf32>
    %79 = arith.index_cast %c4_i32 : i32 to index
    %c0_25 = arith.constant 0 : index
    %c0_26 = arith.constant 0 : index
    %80 = vector.load %arg3[%79, %c0_25, %c0_26] : memref<8x8x128xf32, #tpu.memory_space<vmem>>, vector<1x8x128xf32>
    %81 = vector.shape_cast %80 : vector<1x8x128xf32> to vector<8x128xf32>
    %82 = vector.shape_cast %76 : vector<8x128xf32> to vector<1x8x128xf32>
    tpu.vector_store %arg3[%79, %c0_25, %c0_26], %82 {strides = array<i32>} : memref<8x8x128xf32, #tpu.memory_space<vmem>>, vector<1x8x128xf32>,
    %83 = arith.index_cast %c4_i32 : i32 to index
    %c0_27 = arith.constant 0 : index
    %c0_28 = arith.constant 0 : index
    %84 = vector.load %arg4[%83, %c0_27, %c0_28] : memref<8x8x128xf32, #tpu.memory_space<vmem>>, vector<1x8x128xf32>
    %85 = vector.shape_cast %84 : vector<1x8x128xf32> to vector<8x128xf32>
    %86 = vector.shape_cast %78 : vector<8x128xf32> to vector<1x8x128xf32>
    tpu.vector_store %arg4[%83, %c0_27, %c0_28], %86 {strides = array<i32>} : memref<8x8x128xf32, #tpu.memory_space<vmem>>, vector<1x8x128xf32>,
    %c5_i32 = arith.constant 5 : i32
    %87 = arith.addf %78, %5 : vector<8x128xf32>
    %88 = vector.broadcast %cst_4 : f32 to vector<8x128xf32>
    %89 = arith.cmpf ogt, %87, %88 : vector<8x128xf32>
    %90 = vector.broadcast %cst_5 : f32 to vector<8x128xf32>
    %91 = vector.broadcast %cst_6 : f32 to vector<8x128xf32>
    %92 = arith.select %89, %90, %91 : vector<8x128xi1>, vector<8x128xf32>
    %93 = vector.broadcast %cst_7 : f32 to vector<8x128xf32>
    %94 = arith.select %89, %93, %87 : vector<8x128xi1>, vector<8x128xf32>
    %95 = arith.index_cast %c5_i32 : i32 to index
    %c0_29 = arith.constant 0 : index
    %c0_30 = arith.constant 0 : index
    %96 = vector.load %arg3[%95, %c0_29, %c0_30] : memref<8x8x128xf32, #tpu.memory_space<vmem>>, vector<1x8x128xf32>
    %97 = vector.shape_cast %96 : vector<1x8x128xf32> to vector<8x128xf32>
    %98 = vector.shape_cast %92 : vector<8x128xf32> to vector<1x8x128xf32>
    tpu.vector_store %arg3[%95, %c0_29, %c0_30], %98 {strides = array<i32>} : memref<8x8x128xf32, #tpu.memory_space<vmem>>, vector<1x8x128xf32>,
    %99 = arith.index_cast %c5_i32 : i32 to index
    %c0_31 = arith.constant 0 : index
    %c0_32 = arith.constant 0 : index
    %100 = vector.load %arg4[%99, %c0_31, %c0_32] : memref<8x8x128xf32, #tpu.memory_space<vmem>>, vector<1x8x128xf32>
    %101 = vector.shape_cast %100 : vector<1x8x128xf32> to vector<8x128xf32>
    %102 = vector.shape_cast %94 : vector<8x128xf32> to vector<1x8x128xf32>
    tpu.vector_store %arg4[%99, %c0_31, %c0_32], %102 {strides = array<i32>} : memref<8x8x128xf32, #tpu.memory_space<vmem>>, vector<1x8x128xf32>,
    %c6_i32 = arith.constant 6 : i32
    %103 = arith.addf %94, %5 : vector<8x128xf32>
    %104 = vector.broadcast %cst_4 : f32 to vector<8x128xf32>
    %105 = arith.cmpf ogt, %103, %104 : vector<8x128xf32>
    %106 = vector.broadcast %cst_5 : f32 to vector<8x128xf32>
    %107 = vector.broadcast %cst_6 : f32 to vector<8x128xf32>
    %108 = arith.select %105, %106, %107 : vector<8x128xi1>, vector<8x128xf32>
    %109 = vector.broadcast %cst_7 : f32 to vector<8x128xf32>
    %110 = arith.select %105, %109, %103 : vector<8x128xi1>, vector<8x128xf32>
    %111 = arith.index_cast %c6_i32 : i32 to index
    %c0_33 = arith.constant 0 : index
    %c0_34 = arith.constant 0 : index
    %112 = vector.load %arg3[%111, %c0_33, %c0_34] : memref<8x8x128xf32, #tpu.memory_space<vmem>>, vector<1x8x128xf32>
    %113 = vector.shape_cast %112 : vector<1x8x128xf32> to vector<8x128xf32>
    %114 = vector.shape_cast %108 : vector<8x128xf32> to vector<1x8x128xf32>
    tpu.vector_store %arg3[%111, %c0_33, %c0_34], %114 {strides = array<i32>} : memref<8x8x128xf32, #tpu.memory_space<vmem>>, vector<1x8x128xf32>,
    %115 = arith.index_cast %c6_i32 : i32 to index
    %c0_35 = arith.constant 0 : index
    %c0_36 = arith.constant 0 : index
    %116 = vector.load %arg4[%115, %c0_35, %c0_36] : memref<8x8x128xf32, #tpu.memory_space<vmem>>, vector<1x8x128xf32>
    %117 = vector.shape_cast %116 : vector<1x8x128xf32> to vector<8x128xf32>
    %118 = vector.shape_cast %110 : vector<8x128xf32> to vector<1x8x128xf32>
    tpu.vector_store %arg4[%115, %c0_35, %c0_36], %118 {strides = array<i32>} : memref<8x8x128xf32, #tpu.memory_space<vmem>>, vector<1x8x128xf32>,
    %c7_i32 = arith.constant 7 : i32
    %119 = arith.addf %110, %5 : vector<8x128xf32>
    %120 = vector.broadcast %cst_4 : f32 to vector<8x128xf32>
    %121 = arith.cmpf ogt, %119, %120 : vector<8x128xf32>
    %122 = vector.broadcast %cst_5 : f32 to vector<8x128xf32>
    %123 = vector.broadcast %cst_6 : f32 to vector<8x128xf32>
    %124 = arith.select %121, %122, %123 : vector<8x128xi1>, vector<8x128xf32>
    %125 = vector.broadcast %cst_7 : f32 to vector<8x128xf32>
    %126 = arith.select %121, %125, %119 : vector<8x128xi1>, vector<8x128xf32>
    %127 = arith.index_cast %c7_i32 : i32 to index
    %c0_37 = arith.constant 0 : index
    %c0_38 = arith.constant 0 : index
    %128 = vector.load %arg3[%127, %c0_37, %c0_38] : memref<8x8x128xf32, #tpu.memory_space<vmem>>, vector<1x8x128xf32>
    %129 = vector.shape_cast %128 : vector<1x8x128xf32> to vector<8x128xf32>
    %130 = vector.shape_cast %124 : vector<8x128xf32> to vector<1x8x128xf32>
    tpu.vector_store %arg3[%127, %c0_37, %c0_38], %130 {strides = array<i32>} : memref<8x8x128xf32, #tpu.memory_space<vmem>>, vector<1x8x128xf32>,
    %131 = arith.index_cast %c7_i32 : i32 to index
    %c0_39 = arith.constant 0 : index
    %c0_40 = arith.constant 0 : index
    %132 = vector.load %arg4[%131, %c0_39, %c0_40] : memref<8x8x128xf32, #tpu.memory_space<vmem>>, vector<1x8x128xf32>
    %133 = vector.shape_cast %132 : vector<1x8x128xf32> to vector<8x128xf32>
    %134 = vector.shape_cast %126 : vector<8x128xf32> to vector<1x8x128xf32>
    tpu.vector_store %arg4[%131, %c0_39, %c0_40], %134 {strides = array<i32>} : memref<8x8x128xf32, #tpu.memory_space<vmem>>, vector<1x8x128xf32>,
    %c8_i32 = arith.constant 8 : i32
    %c0_41 = arith.constant 0 : index
    %c0_42 = arith.constant 0 : index
    %135 = vector.load %arg5[%c0_41, %c0_42] : memref<8x128xf32, #tpu.memory_space<vmem>>, vector<8x128xf32>
    tpu.vector_store %arg5[%c0_41, %c0_42], %126 {strides = array<i32>} : memref<8x128xf32, #tpu.memory_space<vmem>>, vector<8x128xf32>,
    return
  }
  func.func @transform_0(%arg0: i32, %arg1: i32) -> (i32, i32) {
    %c0_i32 = arith.constant 0 : i32
    %c0_i32_0 = arith.constant 0 : i32
    return %arg0, %c0_i32 : i32, i32
  }
  func.func @transform_1(%arg0: i32, %arg1: i32) -> (i32, i32, i32) {
    %c0_i32 = arith.constant 0 : i32
    %c0_i32_0 = arith.constant 0 : i32
    return %arg1, %arg0, %c0_i32 : i32, i32, i32
  }
  func.func @transform_2(%arg0: i32, %arg1: i32) -> (i32, i32, i32) {
    %c0_i32 = arith.constant 0 : i32
    %c0_i32_0 = arith.constant 0 : i32
    return %arg1, %arg0, %c0_i32 : i32, i32, i32
  }
}

</mosaic_0001>

<llo_original>
// kernel: tpu_custom_call.1
$region0: #{tpu_custom_call.1}
  #allocation0 [shape = 'u32[]', space=smem, size = 0x4, offset = 0x4, fixed_abs, tag = 'smem constant byte address 0x4 - core index']
  #allocation1 [shape = 'u32[144,128]{1,0:T(1,128)}', space=vmem, size = 0x12000, scoped, tag = 'internal scratch']
  #allocation2 [shape = 'f32[8,128]{1,0:T(8,128)}', space=vmem, size = 0x1000, scoped, tag = 'scratch operand']
  %s0 = inlined_call_operand.hbm [shape: f32[16,128], index: 0, kind: input, shape index: {}]
  %s1 = inlined_call_operand.hbm [shape: f32[8,16,128], index: 1, kind: output, shape index: {0}]
  %s2 = inlined_call_operand.hbm [shape: f32[8,16,128], index: 2, kind: output, shape index: {1}]
  %3 = xla_tuple %s1, %s2
  %s4 = sld [smem:[#allocation0]]
  $region53: #{tpu_custom_call.1} parent=0
    _
  %s6 = ssub.s32 1, %s4
  %s7 = scalar_select 0, %s6, %s4
  $region1: #{tpu_custom_call.1} parent=0
    #allocation3 [shape = 'u8[8192]{0}', space=vmem, size = 0x2000, scoped, tag = 'input window, operand 0']
    #allocation4 [shape = 's32[2]{0}', space=sflag, size = 0x8, scoped, tag = 'scoped memory for tpu_custom_call.1']
    #allocation5 [shape = 's32[2]{0}', space=sflag, size = 0x8, scoped, tag = 'scoped memory for tpu_custom_call.1']
    #allocation6 [shape = 'u8[65536]{0}', space=vmem, size = 0x10000, scoped, tag = 'output window, operand 0']
    #allocation7 [shape = 'u8[65536]{0}', space=vmem, size = 0x10000, scoped, tag = 'output window, operand 1']
    #allocation8 [shape = 's32[2]{0}', space=sflag, size = 0x8, scoped, tag = 'scoped memory for tpu_custom_call.1']
    %8 = vsyncpa [#allocation4], 0
    %s9 = scalar_lea.sflag [#allocation4], 1
    %10 = vsyncpa %s9, 0
    %11 = vsyncpa [#allocation5], 0
    %s12 = scalar_lea.sflag [#allocation5], 1
    %13 = vsyncpa %s12, 0
    %14 = vsyncpa [#allocation8], 0
    %s15 = scalar_lea.sflag [#allocation8], 1
    %16 = vsyncpa %s15, 0
    loop: start=0, step=1, limit=4
    $region2: #{tpu_custom_call.1} parent=1 // loop_pre_header
      _
    $region3: #{tpu_custom_call.1} parent=1 // loop_header
      %s18 = sphi 0, %s22
      %p19 = scmp.ge.s32.totalorder %s18, 4
      %s25 = sphi 0, %s37
      %s26 = sphi 0, %s33
      %s27 = sphi 0, %s25
      %s28 = sphi 0, %s26
      %s29 = sphi 0, %s27
      %s30 = sphi 0, %s28
      %s40 = sphi 0, %s42
      %s43 = sphi 0, %s40
      %s44 = sphi 0, %s43
      %s60 = sphi 0, %s44
      %s68 = sphi 0, %s70
      %s71 = sphi 0, %s68
      %s72 = sphi 0, %s71
      %s88 = sphi 0, %s72
      %s96 = sphi 0, %s98
      %s99 = sphi 0, %s96
      %s100 = sphi 0, %s99
      %s116 = sphi 0, %s100
    $region4: #{tpu_custom_call.1} parent=1 // loop_header_branch
      %21 = sbr.rel (%p19) target = $region8
    $region5: #{tpu_custom_call.1} parent=1 // loop_body
      %s23 = ssub.s32 %s18, 1
      %s24 = ssub.s32 %s18, 2
      %s31 = sadd.s32 1, %s26
      %p32 = scmp.ge.s32.totalorder %s31, 1
      %s33 = scalar_select %p32, 0, %s31
      %s34 = sadd.s32 1, %s25
      %s35 = scalar_select %p32, %s34, %s25
      %p36 = scmp.ge.s32.totalorder %s35, 2
      %s37 = scalar_select %p36, 0, %s35
      %s38 = ssub.s32 %s25, %s37
      %p39 = scmp.eq.s32.totalorder %s38, 0
      %s41 = sadd.s32 %s40, 1
      %s42 = scalar_select %p39, %s40, %s41
      %p45 = pneg %p39
      %p46 = scmp.eq.s32.totalorder %s18, 1
      %p47 = por %p45, %p46
      %p48 = scmp.ne.s32.totalorder %s40, %s43
      %p49 = scmp.eq.s32.totalorder %s18, 0
      %p50 = por %p48, %p49
      %p51 = scmp.ne.s32.totalorder %s40, %s43
      %p52 = scmp.eq.s32.totalorder %s23, 1
      %p53 = por %p51, %p52
      %p54 = scmp.ne.s32.totalorder %s43, %s44
      %p55 = scmp.eq.s32.totalorder %s23, 0
      %p56 = por %p54, %p55
      %p57 = scmp.ne.s32.totalorder %s43, %s44
      %p58 = scmp.eq.s32.totalorder %s24, 1
      %p59 = por %p57, %p58
      %p61 = scmp.ne.s32.totalorder %s44, %s60
      %p62 = scmp.eq.s32.totalorder %s24, 0
      %p63 = por %p61, %p62
      %s64 = ssub.s32 %s26, %s33
      %s65 = ssub.s32 %s25, %s37
      %s66 = sor.u32 %s64, %s65
      %p67 = scmp.eq.s32.totalorder %s66, 0
      %s69 = sadd.s32 %s68, 1
      %s70 = scalar_select %p67, %s68, %s69
      %p73 = pneg %p67
      %p74 = scmp.eq.s32.totalorder %s18, 1
      %p75 = por %p73, %p74
      %p76 = scmp.ne.s32.totalorder %s68, %s71
      %p77 = scmp.eq.s32.totalorder %s18, 0
      %p78 = por %p76, %p77
      %p79 = scmp.ne.s32.totalorder %s68, %s71
      %p80 = scmp.eq.s32.totalorder %s23, 1
      %p81 = por %p79, %p80
      %p82 = scmp.ne.s32.totalorder %s71, %s72
      %p83 = scmp.eq.s32.totalorder %s23, 0
      %p84 = por %p82, %p83
      %p85 = scmp.ne.s32.totalorder %s71, %s72
      %p86 = scmp.eq.s32.totalorder %s24, 1
      %p87 = por %p85, %p86
      %p89 = scmp.ne.s32.totalorder %s72, %s88
      %p90 = scmp.eq.s32.totalorder %s24, 0
      %p91 = por %p89, %p90
      %s92 = ssub.s32 %s26, %s33
      %s93 = ssub.s32 %s25, %s37
      %s94 = sor.u32 %s92, %s93
      %p95 = scmp.eq.s32.totalorder %s94, 0
      %s97 = sadd.s32 %s96, 1
      %s98 = scalar_select %p95, %s96, %s97
      %p101 = pneg %p95
      %p102 = scmp.eq.s32.totalorder %s18, 1
      %p103 = por %p101, %p102
      %p104 = scmp.ne.s32.totalorder %s96, %s99
      %p105 = scmp.eq.s32.totalorder %s18, 0
      %p106 = por %p104, %p105
      %p107 = scmp.ne.s32.totalorder %s96, %s99
      %p108 = scmp.eq.s32.totalorder %s23, 1
      %p109 = por %p107, %p108
      %p110 = scmp.ne.s32.totalorder %s99, %s100
      %p111 = scmp.eq.s32.totalorder %s23, 0
      %p112 = por %p110, %p111
      %p113 = scmp.ne.s32.totalorder %s99, %s100
      %p114 = scmp.eq.s32.totalorder %s24, 1
      %p115 = por %p113, %p114
      %p117 = scmp.ne.s32.totalorder %s100, %s116
      %p118 = scmp.eq.s32.totalorder %s24, 0
      %p119 = por %p117, %p118
      %p120 = scmp.le.s32.totalorder 1, %s18
      %p121 = scmp.lt.s32.totalorder %s18, 3
      %p122 = pnand %p120, %p121
      %p123 = pneg %p122
      // Predicated region
      $region9: #{tpu_custom_call.1} parent=5 // pred_check
        _
      $region10: #{tpu_custom_call.1} parent=5 // pred_check_branch
        %125 = sbr.rel (%p122) target = $region12
      $region11: #{tpu_custom_call.1} parent=5 // pred_region
        %s126 = ssub.s32 %s18, 1
      $region12: #{tpu_custom_call.1} parent=5 // pred_fallthru
        _
      %p127 = scmp.lt.s32.totalorder %s18, 2
      // Predicated region
      $region13: #{tpu_custom_call.1} parent=5 // pred_check
        %p128 = pneg %p127
      $region14: #{tpu_custom_call.1} parent=5 // pred_check_branch
        %130 = sbr.rel (%p128) target = $region16
      $region15: #{tpu_custom_call.1} parent=5 // pred_region
        // Predicated region
        $region17: #{tpu_custom_call.1} parent=15 // pred_check
          %p131 = pneg %p50
        $region18: #{tpu_custom_call.1} parent=15 // pred_check_branch
          %133 = sbr.rel (%p131) target = $region20
        $region19: #{tpu_custom_call.1} parent=15 // pred_region
          %s134 = sand.u32 %s40, 1
          %s135 = scalar_lea.sflag [#allocation4], %s134
          %s136 = sand.u32 %s40, 1
          %s137 = smul.addr %s136, 8
          %s138 = scalar_lea.vmem [#allocation3], %s137
          %s140 = ssub.s32 128, 128
          %141 = vsyncadd %s135, %s140
          %s142 = smul.addr %s25, 128
          %s143 = scalar_lea.hbm %s0, %s142
          %s145 = sshll.u32 %s138, 4
          %s146 = int_to_ptr.vmem [resolvable:$true] %s145
          %148 = dma.hbm_to_vmem [thread:$0]  %s143, 128, %s146, %s135
        $region20: #{tpu_custom_call.1} parent=15 // pred_fallthru
          _
      $region16: #{tpu_custom_call.1} parent=5 // pred_fallthru
        _
      %p149 = scmp.le.s32.totalorder 1, %s18
      %p150 = scmp.lt.s32.totalorder %s18, 3
      %p151 = pnand %p149, %p150
      %p152 = pneg %p151
      // Predicated region
      $region21: #{tpu_custom_call.1} parent=5 // pred_check
        _
      $region22: #{tpu_custom_call.1} parent=5 // pred_check_branch
        %154 = sbr.rel (%p151) target = $region24
      $region23: #{tpu_custom_call.1} parent=5 // pred_region
        %s155 = ssub.s32 %s18, 1
        %s156 = sand.u32 %s43, 1
        %s157 = scalar_lea.sflag [#allocation4], %s156
        %s158 = sand.u32 %s43, 1
        %s159 = smul.addr %s158, 8
        %s160 = scalar_lea.vmem [#allocation3], %s159
        // Predicated region
        $region25: #{tpu_custom_call.1} parent=23 // pred_check
          %p161 = pneg %p56
        $region26: #{tpu_custom_call.1} parent=23 // pred_check_branch
          %163 = sbr.rel (%p161) target = $region28
        $region27: #{tpu_custom_call.1} parent=23 // pred_region
          %164 = dma.done %s157, 128
        $region28: #{tpu_custom_call.1} parent=23 // pred_fallthru
          _
        %s165 = sand.u32 %s43, 1
        %s166 = scalar_lea.sflag [#allocation4], %s165
        %s167 = sand.u32 %s43, 1
        %s168 = smul.addr %s167, 8
        %s169 = scalar_lea.vmem [#allocation3], %s168
        %p170 = pneg %p56
        %p171 = pneg %p53
        %p172 = pneg %p84
        %p173 = pneg %p81
        %s174 = sand.u32 %s71, 1
        %s175 = scalar_lea.sflag [#allocation5], %s174
        %s176 = sand.u32 %s71, 1
        %s177 = smul.addr %s176, 64
        %s178 = scalar_lea.vmem [#allocation6], %s177
        %p179 = pneg %p112
        %p180 = pneg %p109
        %s181 = sand.u32 %s99, 1
        %s182 = scalar_lea.sflag [#allocation8], %s181
        %s183 = sand.u32 %s99, 1
        %s184 = smul.addr %s183, 64
        %s185 = scalar_lea.vmem [#allocation7], %s184
        %s186 = smul.u32 8, %s28
        %s187 = smul.u32 8, %s28
        %p188 = scmp.eq.s32.totalorder %s28, 0
        // Predicated region
        $region29: #{tpu_custom_call.1} parent=23 // pred_check
          %p189 = pneg %p188
        $region30: #{tpu_custom_call.1} parent=23 // pred_check_branch
          %191 = sbr.rel (%p189) target = $region32
        $region31: #{tpu_custom_call.1} parent=23 // pred_region
          %192 = vst [vmem:[#allocation2] sm:$0xff] 0.0
        $region32: #{tpu_custom_call.1} parent=23 // pred_fallthru
          _
        %v193 = vld [vmem:[%s160] sm:$0xff]
        %v194 = vmul.f32 %v193, 0.1
        %v195 = vld [vmem:[#allocation2] sm:$0xff]
        %v196 = vadd.f32 %v195, %v194
        %vm197 = vcmp.gt.f32.partialorder %v196, 1.0
        %v198 = vsel %vm197, 1.0, 0.0
        %v199 = vsel %vm197, 0.0, %v196
        %200 = vst [vmem:[%s178] sm:$0xff] %v198
        %201 = vst [vmem:[%s185] sm:$0xff] %v199
        %v202 = vadd.f32 %v199, %v194
        %vm203 = vcmp.gt.f32.partialorder %v202, 1.0
        %v204 = vsel %vm203, 1.0, 0.0
        %v205 = vsel %vm203, 0.0, %v202
        %s206 = scalar_lea.vmem %s178, 8 [#allocation6]
        %207 = vst [vmem:[%s206] sm:$0xff] %v204
        %s208 = scalar_lea.vmem %s185, 8 [#allocation7]
        %209 = vst [vmem:[%s208] sm:$0xff] %v205
        %v210 = vadd.f32 %v205, %v194
        %vm211 = vcmp.gt.f32.partialorder %v210, 1.0
        %v212 = vsel %vm211, 1.0, 0.0
        %v213 = vsel %vm211, 0.0, %v210
        %s214 = scalar_lea.vmem %s178, 16 [#allocation6]
        %215 = vst [vmem:[%s214] sm:$0xff] %v212
        %s216 = scalar_lea.vmem %s185, 16 [#allocation7]
        %217 = vst [vmem:[%s216] sm:$0xff] %v213
        %v218 = vadd.f32 %v213, %v194
        %vm219 = vcmp.gt.f32.partialorder %v218, 1.0
        %v220 = vsel %vm219, 1.0, 0.0
        %v221 = vsel %vm219, 0.0, %v218
        %s222 = scalar_lea.vmem %s178, 24 [#allocation6]
        %223 = vst [vmem:[%s222] sm:$0xff] %v220
        %s224 = scalar_lea.vmem %s185, 24 [#allocation7]
        %225 = vst [vmem:[%s224] sm:$0xff] %v221
        %v226 = vadd.f32 %v221, %v194
        %vm227 = vcmp.gt.f32.partialorder %v226, 1.0
        %v228 = vsel %vm227, 1.0, 0.0
        %v229 = vsel %vm227, 0.0, %v226
        %s230 = scalar_lea.vmem %s178, 32 [#allocation6]
        %231 = vst [vmem:[%s230] sm:$0xff] %v228
        %s232 = scalar_lea.vmem %s185, 32 [#allocation7]
        %233 = vst [vmem:[%s232] sm:$0xff] %v229
        %v234 = vadd.f32 %v229, %v194
        %vm235 = vcmp.gt.f32.partialorder %v234, 1.0
        %v236 = vsel %vm235, 1.0, 0.0
        %v237 = vsel %vm235, 0.0, %v234
        %s238 = scalar_lea.vmem %s178, 40 [#allocation6]
        %239 = vst [vmem:[%s238] sm:$0xff] %v236
        %s240 = scalar_lea.vmem %s185, 40 [#allocation7]
        %241 = vst [vmem:[%s240] sm:$0xff] %v237
        %v242 = vadd.f32 %v237, %v194
        %vm243 = vcmp.gt.f32.partialorder %v242, 1.0
        %v244 = vsel %vm243, 1.0, 0.0
        %v245 = vsel %vm243, 0.0, %v242
        %s246 = scalar_lea.vmem %s178, 48 [#allocation6]
        %247 = vst [vmem:[%s246] sm:$0xff] %v244
        %s248 = scalar_lea.vmem %s185, 48 [#allocation7]
        %249 = vst [vmem:[%s248] sm:$0xff] %v245
        %v250 = vadd.f32 %v245, %v194
        %vm251 = vcmp.gt.f32.partialorder %v250, 1.0
        %v252 = vsel %vm251, 1.0, 0.0
        %v253 = vsel %vm251, 0.0, %v250
        %s254 = scalar_lea.vmem %s178, 56 [#allocation6]
        %255 = vst [vmem:[%s254] sm:$0xff] %v252
        %s256 = scalar_lea.vmem %s185, 56 [#allocation7]
        %257 = vst [vmem:[%s256] sm:$0xff] %v253
        %258 = vst [vmem:[#allocation2] sm:$0xff] %v253
        %s259 = sand.u32 %s71, 1
        %s260 = scalar_lea.sflag [#allocation5], %s259
        %s261 = sand.u32 %s71, 1
        %s262 = smul.addr %s261, 64
        %s263 = scalar_lea.vmem [#allocation6], %s262
        %s264 = sand.u32 %s99, 1
        %s265 = scalar_lea.sflag [#allocation8], %s264
        %s266 = sand.u32 %s99, 1
        %s267 = smul.addr %s266, 64
        %s268 = scalar_lea.vmem [#allocation7], %s267
        // Predicated region
        $region33: #{tpu_custom_call.1} parent=23 // pred_check
          %p269 = pneg %p81
        $region34: #{tpu_custom_call.1} parent=23 // pred_check_branch
          %271 = sbr.rel (%p269) target = $region36
        $region35: #{tpu_custom_call.1} parent=23 // pred_region
          %s272 = smul.u32 8, %s28
          %s274 = ssub.s32 1024, 1024
          %275 = vsyncadd %s260, %s274
          %s276 = smul.addr %s272, 2
          %s277 = sadd.s32 %s27, %s276
          %s278 = smul.addr %s277, 128
          %s279 = scalar_lea.hbm %s1, %s278
          %s280 = sshll.u32 %s263, 4
          %s281 = int_to_ptr.vmem [resolvable:$true] %s280
          %286 = dma.vmem_to_hbm [thread:$0]  %s281, 1024, %s279, %s260, 128, 256, 8
        $region36: #{tpu_custom_call.1} parent=23 // pred_fallthru
          _
        // Predicated region
        $region37: #{tpu_custom_call.1} parent=23 // pred_check
          %p287 = pneg %p109
        $region38: #{tpu_custom_call.1} parent=23 // pred_check_branch
          %289 = sbr.rel (%p287) target = $region40
        $region39: #{tpu_custom_call.1} parent=23 // pred_region
          %s290 = smul.u32 8, %s28
          %s292 = ssub.s32 1024, 1024
          %293 = vsyncadd %s265, %s292
          %s294 = smul.addr %s290, 2
          %s295 = sadd.s32 %s27, %s294
          %s296 = smul.addr %s295, 128
          %s297 = scalar_lea.hbm %s2, %s296
          %s298 = sshll.u32 %s268, 4
          %s299 = int_to_ptr.vmem [resolvable:$true] %s298
          %304 = dma.vmem_to_hbm [thread:$0]  %s299, 1024, %s297, %s265, 128, 256, 8
        $region40: #{tpu_custom_call.1} parent=23 // pred_fallthru
          _
      $region24: #{tpu_custom_call.1} parent=5 // pred_fallthru
        _
      %p305 = scmp.le.s32.totalorder 2, %s18
      // Predicated region
      $region41: #{tpu_custom_call.1} parent=5 // pred_check
        %p306 = pneg %p305
      $region42: #{tpu_custom_call.1} parent=5 // pred_check_branch
        %308 = sbr.rel (%p306) target = $region44
      $region43: #{tpu_custom_call.1} parent=5 // pred_region
        %s309 = ssub.s32 %s18, 2
        // Predicated region
        $region45: #{tpu_custom_call.1} parent=43 // pred_check
          %p310 = pneg %p87
        $region46: #{tpu_custom_call.1} parent=43 // pred_check_branch
          %312 = sbr.rel (%p310) target = $region48
        $region47: #{tpu_custom_call.1} parent=43 // pred_region
          %s313 = sand.u32 %s72, 1
          %s314 = scalar_lea.sflag [#allocation5], %s313
          %s315 = sand.u32 %s72, 1
          %s316 = smul.addr %s315, 64
          %s317 = scalar_lea.vmem [#allocation6], %s316
          %318 = dma.done %s314, 1024
        $region48: #{tpu_custom_call.1} parent=43 // pred_fallthru
          _
        // Predicated region
        $region49: #{tpu_custom_call.1} parent=43 // pred_check
          %p319 = pneg %p115
        $region50: #{tpu_custom_call.1} parent=43 // pred_check_branch
          %321 = sbr.rel (%p319) target = $region52
        $region51: #{tpu_custom_call.1} parent=43 // pred_region
          %s322 = sand.u32 %s100, 1
          %s323 = scalar_lea.sflag [#allocation8], %s322
          %s324 = sand.u32 %s100, 1
          %s325 = smul.addr %s324, 64
          %s326 = scalar_lea.vmem [#allocation7], %s325
          %327 = dma.done %s323, 1024
        $region52: #{tpu_custom_call.1} parent=43 // pred_fallthru
          _
      $region44: #{tpu_custom_call.1} parent=5 // pred_fallthru
        _
    $region6: #{tpu_custom_call.1} parent=1 // loop_footer
      %s22 = sadd.s32 1, %s18
    $region7: #{tpu_custom_call.1} parent=1 // loop_footer_branch
      %17 = sbr.rel target = $region3
    $region8: #{tpu_custom_call.1} parent=1 // loop_exit
      _
    %328 = vsyncpa [#allocation4], 1
    %s329 = scalar_lea.sflag [#allocation4], 1
    %330 = vsyncpa %s329, 1
    %331 = vsyncpa [#allocation5], 1
    %s332 = scalar_lea.sflag [#allocation5], 1
    %333 = vsyncpa %s332, 1
    %334 = vsyncpa [#allocation8], 1
    %s335 = scalar_lea.sflag [#allocation8], 1
    %336 = vsyncpa %s335, 1

</llo_original>
